<compile_context>
chip_gen: v7x
topology: tpu7x:2x2x1
jax: 0.10.0
libtpu: 0.0.40
codegen_flags: <defaults>
</compile_context>

<pallas_src>
from functools import partial

import jax
import jax.numpy as jnp
from jax.experimental import pallas as pl
from jax.experimental.pallas import tpu as pltpu


def _round_up(x: int, m: int) -> int:
    return ((x + m - 1) // m) * m


def logreg_kernel(w_ref, b_ref, x_ref, o_ref):
    # w_ref: (F,)            f32 in SMEM   (linear weights)
    # b_ref: (1,)            f32 in SMEM   (bias)
    # x_ref: (F, TB, 128)    f32 in VMEM   (feature-major, sublane/lane-dense)
    # o_ref: (TB, 128)       f32 in VMEM   (dense output slab)
    num_features = x_ref.shape[0]

    # Start from the bias, then F=10 unrolled full-vreg VPU multiply-adds.
    z = jnp.full(o_ref.shape, b_ref[0], dtype=jnp.float32)
    for f in range(num_features):            # static unroll, F = 10
        z = z + w_ref[f] * x_ref[f]

    # sigmoid(z) = 0.5 * tanh(0.5 * z) + 0.5   (tanh goes to the EUP; avoids
    # the exp + Newton-refined divide chain on the VALU).
    o_ref[...] = 0.5 * jnp.tanh(0.5 * z) + 0.5


@partial(jax.jit, static_argnames=("tile_n",))
def logistic_regression(x, weight, bias, *, tile_n=65536):
    """Forward pass matching torch.nn.Linear(10, 1) + torch.sigmoid.

    x:      (N, 10) float32
    weight: (1, 10) float32   (PyTorch layout: (out_features, in_features))
    bias:   (1,)    float32
    returns (N, 1)  float32
    """
    n, f = x.shape

    # Tile size: multiple of 1024 rows so blocks are (>=8, 128)-legal.
    tile_n = max(1024, _round_up(min(tile_n, n), 1024))
    # Prefer >=2 grid steps for large N so v7x can shard the batch axis across
    # its two TensorCores (harmless on v5e/v6e).
    if tile_n >= n and n > 16384:
        tile_n = _round_up(pl.cdiv(n, 2), 1024)

    num_tiles = pl.cdiv(n, tile_n)
    n_pad = num_tiles * tile_n
    nb = n_pad // 128          # total 128-row blocks
    tb = tile_n // 128         # 128-row blocks per grid step (multiple of 8)

    # Layout plumbing (fused by jit): pad batch, cast, go feature-major and
    # sublane/lane-dense: x3d[f, b, l] == x[b*128 + l, f].
    x_pad = jnp.pad(x.astype(jnp.float32), ((0, n_pad - n), (0, 0)))
    x3d = x_pad.T.reshape(f, nb, 128)
    w_vec = weight.reshape(-1).astype(jnp.float32)   # (F,)
    b_vec = bias.reshape(-1).astype(jnp.float32)     # (1,)

    out = pl.pallas_call(
        logreg_kernel,
        out_shape=jax.ShapeDtypeStruct((nb, 128), jnp.float32),
        grid=(num_tiles,),
        in_specs=[
            pl.BlockSpec(memory_space=pltpu.MemorySpace.SMEM),   # weights
            pl.BlockSpec(memory_space=pltpu.MemorySpace.SMEM),   # bias
            pl.BlockSpec((f, tb, 128), lambda i: (0, i, 0)),     # x tile
        ],
        out_specs=pl.BlockSpec((tb, 128), lambda i: (i, 0)),     # dense slab
        compiler_params=pltpu.CompilerParams(
            dimension_semantics=("parallel",)),
    )(w_vec, b_vec, x3d)

    # Drop batch padding and restore the (N, 1) module output shape (fused).
    return out.reshape(n_pad, 1)[:n]


if __name__ == "__main__":
    key = jax.random.PRNGKey(0)
    kx, kw, kb, kx2 = jax.random.split(key, 4)

    in_features, out_features = 10, 1

    # Deterministic synthetic parameters (shapes from nn.Linear(10, 1)).
    bound = 1.0 / jnp.sqrt(in_features)
    weight = jax.random.uniform(
        kw, (out_features, in_features), jnp.float32, -bound, bound)
    bias = jax.random.uniform(kb, (out_features,), jnp.float32, -bound, bound)

    # Small batch (the module's nominal use case).
    x_small = jax.random.normal(kx, (8, in_features), jnp.float32)
    y_small = jax.block_until_ready(logistic_regression(x_small, weight, bias))
    ref_small = jax.nn.sigmoid(x_small @ weight.T + bias)
    assert y_small.shape == (8, out_features)
    assert jnp.allclose(y_small, ref_small, atol=1e-5, rtol=1e-5)

    # Batch that is not a multiple of the tile -> exercises the tiled grid
    # (3 steps of 1024 rows) and the padding / un-padding path.
    x_big = jax.random.normal(kx2, (3000, in_features), jnp.float32)
    y_big = jax.block_until_ready(
        logistic_regression(x_big, weight, bias, tile_n=1024))
    ref_big = jax.nn.sigmoid(x_big @ weight.T + bias)
    assert y_big.shape == (3000, out_features)
    assert jnp.allclose(y_big, ref_big, atol=1e-5, rtol=1e-5)

    print("KERNEL_OK")
</pallas_src>

<mosaic_0001>
module attributes {stable_mosaic.version = 11 : i64} {
  func.func @logreg_kernel(%arg0: i32, %arg1: memref<10xf32, #tpu.memory_space<smem>>, %arg2: memref<1xf32, #tpu.memory_space<smem>>, %arg3: memref<10x8x128xf32, #tpu.memory_space<vmem>>, %arg4: memref<8x128xf32, #tpu.memory_space<vmem>>) attributes {dimension_semantics = [#tpu.dimension_semantics<parallel>], iteration_bounds = array<i64: 1>, scalar_prefetch = 0 : i64, scratch_operands = 0 : i64, tpu.core_type = #tpu.core_type<tc>, window_params = [{transform_indices = @transform_0, window_bounds = array<i64: 10>}, {transform_indices = @transform_1, window_bounds = array<i64: 1>}, {transform_indices = @transform_2, window_bounds = array<i64: 10, 8, 128>}, {transform_indices = @transform_3, window_bounds = array<i64: 8, 128>}]} {
    %c0 = arith.constant 0 : index
    %0 = memref.load %arg2[%c0] : memref<1xf32, #tpu.memory_space<smem>>
    %1 = vector.broadcast %0 : f32 to vector<8x128xf32>
    %c0_0 = arith.constant 0 : index
    %2 = memref.load %arg1[%c0_0] : memref<10xf32, #tpu.memory_space<smem>>
    %c0_1 = arith.constant 0 : index
    %c0_2 = arith.constant 0 : index
    %c0_3 = arith.constant 0 : index
    %3 = vector.load %arg3[%c0_1, %c0_2, %c0_3] : memref<10x8x128xf32, #tpu.memory_space<vmem>>, vector<1x8x128xf32>
    %4 = vector.shape_cast %3 : vector<1x8x128xf32> to vector<8x128xf32>
    %5 = vector.broadcast %2 : f32 to vector<8x128xf32>
    %6 = arith.mulf %5, %4 : vector<8x128xf32>
    %7 = arith.addf %1, %6 : vector<8x128xf32>
    %c1 = arith.constant 1 : index
    %8 = memref.load %arg1[%c1] : memref<10xf32, #tpu.memory_space<smem>>
    %c1_4 = arith.constant 1 : index
    %c0_5 = arith.constant 0 : index
    %c0_6 = arith.constant 0 : index
    %9 = vector.load %arg3[%c1_4, %c0_5, %c0_6] : memref<10x8x128xf32, #tpu.memory_space<vmem>>, vector<1x8x128xf32>
    %10 = vector.shape_cast %9 : vector<1x8x128xf32> to vector<8x128xf32>
    %11 = vector.broadcast %8 : f32 to vector<8x128xf32>
    %12 = arith.mulf %11, %10 : vector<8x128xf32>
    %13 = arith.addf %7, %12 : vector<8x128xf32>
    %c2 = arith.constant 2 : index
    %14 = memref.load %arg1[%c2] : memref<10xf32, #tpu.memory_space<smem>>
    %c2_7 = arith.constant 2 : index
    %c0_8 = arith.constant 0 : index
    %c0_9 = arith.constant 0 : index
    %15 = vector.load %arg3[%c2_7, %c0_8, %c0_9] : memref<10x8x128xf32, #tpu.memory_space<vmem>>, vector<1x8x128xf32>
    %16 = vector.shape_cast %15 : vector<1x8x128xf32> to vector<8x128xf32>
    %17 = vector.broadcast %14 : f32 to vector<8x128xf32>
    %18 = arith.mulf %17, %16 : vector<8x128xf32>
    %19 = arith.addf %13, %18 : vector<8x128xf32>
    %c3 = arith.constant 3 : index
    %20 = memref.load %arg1[%c3] : memref<10xf32, #tpu.memory_space<smem>>
    %c3_10 = arith.constant 3 : index
    %c0_11 = arith.constant 0 : index
    %c0_12 = arith.constant 0 : index
    %21 = vector.load %arg3[%c3_10, %c0_11, %c0_12] : memref<10x8x128xf32, #tpu.memory_space<vmem>>, vector<1x8x128xf32>
    %22 = vector.shape_cast %21 : vector<1x8x128xf32> to vector<8x128xf32>
    %23 = vector.broadcast %20 : f32 to vector<8x128xf32>
    %24 = arith.mulf %23, %22 : vector<8x128xf32>
    %25 = arith.addf %19, %24 : vector<8x128xf32>
    %c4 = arith.constant 4 : index
    %26 = memref.load %arg1[%c4] : memref<10xf32, #tpu.memory_space<smem>>
    %c4_13 = arith.constant 4 : index
    %c0_14 = arith.constant 0 : index
    %c0_15 = arith.constant 0 : index
    %27 = vector.load %arg3[%c4_13, %c0_14, %c0_15] : memref<10x8x128xf32, #tpu.memory_space<vmem>>, vector<1x8x128xf32>
    %28 = vector.shape_cast %27 : vector<1x8x128xf32> to vector<8x128xf32>
    %29 = vector.broadcast %26 : f32 to vector<8x128xf32>
    %30 = arith.mulf %29, %28 : vector<8x128xf32>
    %31 = arith.addf %25, %30 : vector<8x128xf32>
    %c5 = arith.constant 5 : index
    %32 = memref.load %arg1[%c5] : memref<10xf32, #tpu.memory_space<smem>>
    %c5_16 = arith.constant 5 : index
    %c0_17 = arith.constant 0 : index
    %c0_18 = arith.constant 0 : index
    %33 = vector.load %arg3[%c5_16, %c0_17, %c0_18] : memref<10x8x128xf32, #tpu.memory_space<vmem>>, vector<1x8x128xf32>
    %34 = vector.shape_cast %33 : vector<1x8x128xf32> to vector<8x128xf32>
    %35 = vector.broadcast %32 : f32 to vector<8x128xf32>
    %36 = arith.mulf %35, %34 : vector<8x128xf32>
    %37 = arith.addf %31, %36 : vector<8x128xf32>
    %c6 = arith.constant 6 : index
    %38 = memref.load %arg1[%c6] : memref<10xf32, #tpu.memory_space<smem>>
    %c6_19 = arith.constant 6 : index
    %c0_20 = arith.constant 0 : index
    %c0_21 = arith.constant 0 : index
    %39 = vector.load %arg3[%c6_19, %c0_20, %c0_21] : memref<10x8x128xf32, #tpu.memory_space<vmem>>, vector<1x8x128xf32>
    %40 = vector.shape_cast %39 : vector<1x8x128xf32> to vector<8x128xf32>
    %41 = vector.broadcast %38 : f32 to vector<8x128xf32>
    %42 = arith.mulf %41, %40 : vector<8x128xf32>
    %43 = arith.addf %37, %42 : vector<8x128xf32>
    %c7 = arith.constant 7 : index
    %44 = memref.load %arg1[%c7] : memref<10xf32, #tpu.memory_space<smem>>
    %c7_22 = arith.constant 7 : index
    %c0_23 = arith.constant 0 : index
    %c0_24 = arith.constant 0 : index
    %45 = vector.load %arg3[%c7_22, %c0_23, %c0_24] : memref<10x8x128xf32, #tpu.memory_space<vmem>>, vector<1x8x128xf32>
    %46 = vector.shape_cast %45 : vector<1x8x128xf32> to vector<8x128xf32>
    %47 = vector.broadcast %44 : f32 to vector<8x128xf32>
    %48 = arith.mulf %47, %46 : vector<8x128xf32>
    %49 = arith.addf %43, %48 : vector<8x128xf32>
    %c8 = arith.constant 8 : index
    %50 = memref.load %arg1[%c8] : memref<10xf32, #tpu.memory_space<smem>>
    %c8_25 = arith.constant 8 : index
    %c0_26 = arith.constant 0 : index
    %c0_27 = arith.constant 0 : index
    %51 = vector.load %arg3[%c8_25, %c0_26, %c0_27] : memref<10x8x128xf32, #tpu.memory_space<vmem>>, vector<1x8x128xf32>
    %52 = vector.shape_cast %51 : vector<1x8x128xf32> to vector<8x128xf32>
    %53 = vector.broadcast %50 : f32 to vector<8x128xf32>
    %54 = arith.mulf %53, %52 : vector<8x128xf32>
    %55 = arith.addf %49, %54 : vector<8x128xf32>
    %c9 = arith.constant 9 : index
    %56 = memref.load %arg1[%c9] : memref<10xf32, #tpu.memory_space<smem>>
    %c9_28 = arith.constant 9 : index
    %c0_29 = arith.constant 0 : index
    %c0_30 = arith.constant 0 : index
    %57 = vector.load %arg3[%c9_28, %c0_29, %c0_30] : memref<10x8x128xf32, #tpu.memory_space<vmem>>, vector<1x8x128xf32>
    %58 = vector.shape_cast %57 : vector<1x8x128xf32> to vector<8x128xf32>
    %59 = vector.broadcast %56 : f32 to vector<8x128xf32>
    %60 = arith.mulf %59, %58 : vector<8x128xf32>
    %61 = arith.addf %55, %60 : vector<8x128xf32>
    %cst = arith.constant 5.000000e-01 : f32
    %62 = vector.broadcast %cst : f32 to vector<8x128xf32>
    %63 = arith.mulf %62, %61 : vector<8x128xf32>
    %64 = math.tanh %63 : vector<8x128xf32>
    %cst_31 = arith.constant 5.000000e-01 : f32
    %65 = vector.broadcast %cst_31 : f32 to vector<8x128xf32>
    %66 = arith.mulf %65, %64 : vector<8x128xf32>
    %cst_32 = arith.constant 5.000000e-01 : f32
    %67 = vector.broadcast %cst_32 : f32 to vector<8x128xf32>
    %68 = arith.addf %66, %67 : vector<8x128xf32>
    %c0_33 = arith.constant 0 : index
    %c0_34 = arith.constant 0 : index
    %69 = vector.load %arg4[%c0_33, %c0_34] : memref<8x128xf32, #tpu.memory_space<vmem>>, vector<8x128xf32>
    tpu.vector_store %arg4[%c0_33, %c0_34], %68 {strides = array<i32>} : memref<8x128xf32, #tpu.memory_space<vmem>>, vector<8x128xf32>,
    return
  }
  func.func @transform_0(%arg0: i32) -> i32 {
    %c0_i32 = arith.constant 0 : i32
    %c0_i32_0 = arith.constant 0 : i32
    return %c0_i32 : i32
  }
  func.func @transform_1(%arg0: i32) -> i32 {
    %c0_i32 = arith.constant 0 : i32
    %c0_i32_0 = arith.constant 0 : i32
    return %c0_i32 : i32
  }
  func.func @transform_2(%arg0: i32) -> (i32, i32, i32) {
    %c0_i32 = arith.constant 0 : i32
    %c0_i32_0 = arith.constant 0 : i32
    %c0_i32_1 = arith.constant 0 : i32
    return %c0_i32, %arg0, %c0_i32_0 : i32, i32, i32
  }
  func.func @transform_3(%arg0: i32) -> (i32, i32) {
    %c0_i32 = arith.constant 0 : i32
    %c0_i32_0 = arith.constant 0 : i32
    return %arg0, %c0_i32 : i32, i32
  }
}

</mosaic_0001>

<llo_original>
// kernel: logistic_regression.1
$region0: #{logistic_regression.1}
  #allocation0 [shape = 'u32[]', space=smem, size = 0x4, offset = 0x4, fixed_abs, tag = 'smem constant byte address 0x4 - core index']
  #allocation1 [shape = 'u32[144,128]{1,0:T(1,128)}', space=vmem, size = 0x12000, scoped, tag = 'internal scratch']
  #allocation2 [shape = 'f32[1]{0:T(128)S(6)}', space=smem, size = 0x200, scoped, tag = 'scoped memory for logistic_regression.1']
  %s0 = inlined_call_operand.vmem [shape: f32[10], index: 0, kind: input, shape index: {}]
  %s1 = inlined_call_operand.<no memory space> [shape: f32[1], index: 1, kind: input, shape index: {}]
  %s2 = inlined_call_operand.vmem [shape: f32[10,8,128], index: 2, kind: input, shape index: {}]
  %s3 = inlined_call_operand.vmem [shape: f32[8,128], index: 3, kind: output, shape index: {}]
  %s4 = sld [smem:[#allocation0]]
  $region26: #{logistic_regression.1} parent=0
    _
  %s6 = ssub.s32 1, %s4
  %s7 = scalar_select 0, %s6, %s4
  %8 = sst [smem:[#allocation2]] %s1
  $region1: #{logistic_regression.1} parent=0
    #allocation3 [shape = 'u8[512]{0}', space=smem, size = 0x200, scoped, tag = 'input window, operand 0, single buffered']
    #allocation4 [shape = 's32[1]{0}', space=sflag, size = 0x4, scoped, tag = 'scoped memory for logistic_regression.1']
    %9 = vsyncpa [#allocation4], 0
    // Predicated region
    $region2: #{logistic_regression.1} parent=1 // pred_check
      _
    $region3: #{logistic_regression.1} parent=1 // pred_check_branch
      %11 = sbr.rel (0) target = $region5
    $region4: #{logistic_regression.1} parent=1 // pred_region
      %s13 = ssub.s32 16, 16
      %14 = vsyncadd [#allocation4], %s13
      %s16 = sshll.u32 %s0, 4
      %s17 = int_to_ptr.vmem [resolvable:$true] %s16
      %19 = dma.vmem_to_smem %s17, 16, [#allocation3], [#allocation4]
    $region5: #{logistic_regression.1} parent=1 // pred_fallthru
      _
    // Predicated region
    $region6: #{logistic_regression.1} parent=1 // pred_check
      _
    $region7: #{logistic_regression.1} parent=1 // pred_check_branch
      %21 = sbr.rel (0) target = $region9
    $region8: #{logistic_regression.1} parent=1 // pred_region
      _
    $region9: #{logistic_regression.1} parent=1 // pred_fallthru
      _
    // Predicated region
    $region10: #{logistic_regression.1} parent=1 // pred_check
      _
    $region11: #{logistic_regression.1} parent=1 // pred_check_branch
      %23 = sbr.rel (0) target = $region13
    $region12: #{logistic_regression.1} parent=1 // pred_region
      _
    $region13: #{logistic_regression.1} parent=1 // pred_fallthru
      _
    // Predicated region
    $region14: #{logistic_regression.1} parent=1 // pred_check
      _
    $region15: #{logistic_regression.1} parent=1 // pred_check_branch
      %25 = sbr.rel (0) target = $region17
    $region16: #{logistic_regression.1} parent=1 // pred_region
      %26 = dma.done [#allocation4], 16
    $region17: #{logistic_regression.1} parent=1 // pred_fallthru
      _
    %27 = sfence
    %s28 = sld [smem:[#allocation2]]
    %v29 = vstv %s28
    %s30 = sld [smem:[#allocation3]]
    %v31 = vld [vmem:[%s2] sm:$0xff]
    %v32 = vstv %s30
    %v33 = vmul.f32 %v32, %v31
    %v34 = vadd.f32 %v29, %v33
    %s35 = sld [smem:[#allocation3 + $0x1]]
    %s36 = scalar_lea.vmem %s2, 8
    %v37 = vld [vmem:[%s36] sm:$0xff]
    %v38 = vstv %s35
    %v39 = vmul.f32 %v38, %v37
    %v40 = vadd.f32 %v34, %v39
    %s41 = sld [smem:[#allocation3 + $0x2]]
    %s42 = scalar_lea.vmem %s2, 16
    %v43 = vld [vmem:[%s42] sm:$0xff]
    %v44 = vstv %s41
    %v45 = vmul.f32 %v44, %v43
    %v46 = vadd.f32 %v40, %v45
    %s47 = sld [smem:[#allocation3 + $0x3]]
    %s48 = scalar_lea.vmem %s2, 24
    %v49 = vld [vmem:[%s48] sm:$0xff]
    %v50 = vstv %s47
    %v51 = vmul.f32 %v50, %v49
    %v52 = vadd.f32 %v46, %v51
    %s53 = sld [smem:[#allocation3 + $0x4]]
    %s54 = scalar_lea.vmem %s2, 32
    %v55 = vld [vmem:[%s54] sm:$0xff]
    %v56 = vstv %s53
    %v57 = vmul.f32 %v56, %v55
    %v58 = vadd.f32 %v52, %v57
    %s59 = sld [smem:[#allocation3 + $0x5]]
    %s60 = scalar_lea.vmem %s2, 40
    %v61 = vld [vmem:[%s60] sm:$0xff]
    %v62 = vstv %s59
    %v63 = vmul.f32 %v62, %v61
    %v64 = vadd.f32 %v58, %v63
    %s65 = sld [smem:[#allocation3 + $0x6]]
    %s66 = scalar_lea.vmem %s2, 48
    %v67 = vld [vmem:[%s66] sm:$0xff]
    %v68 = vstv %s65
    %v69 = vmul.f32 %v68, %v67
    %v70 = vadd.f32 %v64, %v69
    %s71 = sld [smem:[#allocation3 + $0x7]]
    %s72 = scalar_lea.vmem %s2, 56
    %v73 = vld [vmem:[%s72] sm:$0xff]
    %v74 = vstv %s71
    %v75 = vmul.f32 %v74, %v73
    %v76 = vadd.f32 %v70, %v75
    %s77 = sld [smem:[#allocation3 + $0x8]]
    %s78 = scalar_lea.vmem %s2, 64
    %v79 = vld [vmem:[%s78] sm:$0xff]
    %v80 = vstv %s77
    %v81 = vmul.f32 %v80, %v79
    %v82 = vadd.f32 %v76, %v81
    %s83 = sld [smem:[#allocation3 + $0x9]]
    %s84 = scalar_lea.vmem %s2, 72
    %v85 = vld [vmem:[%s84] sm:$0xff]
    %v86 = vstv %s83
    %v87 = vmul.f32 %v86, %v85
    %v88 = vadd.f32 %v82, %v87
    %v89 = vmul.f32 %v88, 0.5
    %v90 = vtanh.pop %v89
    %v91 = vmul.f32 %v90, 0.5
    %v92 = vadd.f32 %v91, 0.5
    %93 = vst [vmem:[%s3] sm:$0xff] %v92
    // Predicated region
    $region18: #{logistic_regression.1} parent=1 // pred_check
      _
    $region19: #{logistic_regression.1} parent=1 // pred_check_branch
      %95 = sbr.rel (0) target = $region21
    $region20: #{logistic_regression.1} parent=1 // pred_region
      _
    $region21: #{logistic_regression.1} parent=1 // pred_fallthru
      _
    // Predicated region
    $region22: #{logistic_regression.1} parent=1 // pred_check
      _
    $region23: #{logistic_regression.1} parent=1 // pred_check_branch
      %97 = sbr.rel (0) target = $region25
    $region24: #{logistic_regression.1} parent=1 // pred_region
      _
    $region25: #{logistic_regression.1} parent=1 // pred_fallthru
      _
    %98 = vsyncpa [#allocation4], 1

</llo_original>
